<compile_context>
chip_gen: v7x
topology: tpu7x:2x2x1
jax: 0.10.0
libtpu: 0.0.40
codegen_flags: <defaults>
</compile_context>

<pallas_src>
import math
import functools

import jax
import jax.numpy as jnp
from jax.experimental import pallas as pl
from jax.experimental.pallas import tpu as pltpu


# ---------------------------------------------------------------------------
# Kernel 1: tiled linear  (M, K) @ (K, N) + b   — Q/K/V (fused or separate)
# ---------------------------------------------------------------------------
def _linear_kernel(x_ref, w_ref, b_ref, o_ref):
    x = x_ref[...].astype(jnp.bfloat16)          # bf16 MXU operands, f32 accumulate
    acc = jnp.dot(x, w_ref[...], preferred_element_type=jnp.float32)
    o_ref[...] = (acc + b_ref[...]).astype(o_ref.dtype)


def _pallas_linear(x2d, w_t_bf16, b_row_f32, *, tile_m=512, out_dtype=jnp.bfloat16):
    """x2d:(M,K) f32 @ w_t:(K,N) bf16 + b:(1,N) f32 -> (M,N) out_dtype."""
    M, K = x2d.shape
    N = w_t_bf16.shape[1]
    # Full-dim block when M is small (no padding); otherwise 512-row tiles with
    # a cdiv grid (last block is masked by Pallas, no HBM pad copy).
    tm = M if M <= tile_m else tile_m
    grid_m = pl.cdiv(M, tm)

    vmem_need = (2 * (tm * K * 4 + tm * N * 2)       # double-buffered x tile + out tile
                 + K * N * 2 + N * 4)                # resident weight + bias
    return pl.pallas_call(
        _linear_kernel,
        out_shape=jax.ShapeDtypeStruct((M, N), out_dtype),
        grid=(grid_m,),
        in_specs=[
            pl.BlockSpec((tm, K), lambda i: (i, 0)),      # activations, tiled over M
            pl.BlockSpec((K, N), lambda i: (0, 0)),       # weight, resident
            pl.BlockSpec((1, N), lambda i: (0, 0)),       # bias, resident
        ],
        out_specs=pl.BlockSpec((tm, N), lambda i: (i, 0)),  # lane-dense output
        compiler_params=pltpu.CompilerParams(
            dimension_semantics=("parallel",),
            vmem_limit_bytes=int(min(max(2 * vmem_need, 16 * 2**20), 64 * 2**20))),
        cost_estimate=pl.CostEstimate(
            flops=2 * M * K * N, transcendentals=0,
            bytes_accessed=int(4 * M * K + 2 * (K * N + M * N) + 4 * N)),
    )(x2d, w_t_bf16, b_row_f32)


# ---------------------------------------------------------------------------
# Kernel 2: fused attention core per (batch, q-tile)
# ---------------------------------------------------------------------------
def _attention_kernel(q_ref, k_ref, v_ref, mask_ref, wo_ref, bo_ref, o_ref, ctx_ref,
                      *, n_head, d_k):
    q = q_ref[0]                                   # (tq, F) bf16 (already * 1/sqrt(d_k))
    k = k_ref[0]                                   # (T2, F) bf16
    v = v_ref[0]                                   # (T2, F) bf16

    # Mask work hoisted out of the head loop (computed once per grid step).
    valid = mask_ref[0] != 0                       # (Tm, T2), Tm in {1, tq}
    neg_bias = jnp.where(valid, 0.0, -1e30).astype(jnp.float32)
    # Rows with no valid key at all -> output 0 (matches torch's post-softmax fill).
    row_valid = (jnp.max(neg_bias, axis=-1, keepdims=True) == 0.0).astype(jnp.float32)

    for h in range(n_head):                        # small static unroll over heads
        lo = h * d_k
        qh = jax.lax.slice_in_dim(q, lo, lo + d_k, axis=1)     # (tq, d_k) bf16
        kh = jax.lax.slice_in_dim(k, lo, lo + d_k, axis=1)     # (T2, d_k) bf16
        vh = jax.lax.slice_in_dim(v, lo, lo + d_k, axis=1)     # (T2, d_k) bf16

        # q_h @ k_h^T (NT matmul on the MXU), f32 accumulation.
        s = jax.lax.dot_general(qh, kh, (((1,), (1,)), ((), ())),
                                preferred_element_type=jnp.float32)     # (tq, T2)
        s = s + neg_bias                           # additive mask bias
        row_max = jnp.max(s, axis=-1, keepdims=True)
        e = jnp.exp(s - row_max)                   # f32; masked lanes underflow to 0
        denom = jnp.sum(e, axis=-1, keepdims=True)                      # >= 1
        attn = e * pl.reciprocal(denom, approx=True)
        # TODO(synk): nn.Dropout(p) on attn is identity in eval mode; not applied.

        # Write this head's context into its static lane slice (no concatenate).
        ctx_ref[:, lo:lo + d_k] = jnp.dot(attn.astype(jnp.bfloat16), vh,
                                          preferred_element_type=jnp.float32)

    ctx = (ctx_ref[...] * row_valid).astype(jnp.bfloat16)               # (tq, F)
    out = jnp.dot(ctx, wo_ref[...], preferred_element_type=jnp.float32) + bo_ref[...]
    o_ref[0] = out.astype(o_ref.dtype)


def _pallas_attention(q_arr, k_arr, v_arr, mask_i8, wo_t_bf16, bo_row_f32,
                      *, n_head, n_feat, q_block=0, k_block=0, v_block=0, tile_q=256):
    """q/k/v arrays may be separate (B,T,F) tensors or the SAME fused (B,T,3F)
    tensor addressed via lane-block indices q_block/k_block/v_block."""
    B, T1 = q_arr.shape[0], q_arr.shape[1]
    T2 = k_arr.shape[1]
    F = n_feat
    Tm = mask_i8.shape[1]
    d_k = F // n_head

    # tq == T1 (full dim, always legal) for short sequences, else 256 (mult of 32
    # so the int8 mask tile and bf16 q tile both satisfy sublane tiling).
    tq = T1 if T1 <= tile_q else tile_q
    grid_q = pl.cdiv(T1, tq)

    mask_tiled = (Tm != 1)
    tmask = tq if mask_tiled else 1
    if mask_tiled:
        mask_spec = pl.BlockSpec((1, tmask, T2), lambda b, i: (b, i, 0))
    else:
        mask_spec = pl.BlockSpec((1, 1, T2), lambda b, i: (b, 0, 0))

    kern = functools.partial(_attention_kernel, n_head=n_head, d_k=d_k)
    flops = B * (4 * T1 * T2 * F + 2 * T1 * F * F)
    bytes_accessed = (2 * B * (T1 + 2 * T2) * F      # q, k, v (bf16)
                      + 4 * B * T1 * F               # output (f32)
                      + 2 * F * F + 4 * F            # Wout (bf16) + bias (f32)
                      + B * Tm * T2)                 # mask (int8)
    vmem_need = (2 * 2 * (tq + 2 * T2) * F           # double-buffered q/k/v tiles
                 + 2 * 4 * tq * F                    # double-buffered out tile
                 + 2 * F * F + 4 * F                 # resident Wout + bias
                 + 4 * tq * F                        # ctx scratch
                 + 2 * tmask * T2                    # mask tile
                 + 12 * tq * T2)                     # in-kernel score/exp temporaries

    return pl.pallas_call(
        kern,
        out_shape=jax.ShapeDtypeStruct((B, T1, F), jnp.float32),
        grid=(B, grid_q),
        in_specs=[
            pl.BlockSpec((1, tq, F), lambda b, i: (b, i, q_block)),   # q tile
            pl.BlockSpec((1, T2, F), lambda b, i: (b, 0, k_block)),   # k (full T2)
            pl.BlockSpec((1, T2, F), lambda b, i: (b, 0, v_block)),   # v (full T2)
            mask_spec,
            pl.BlockSpec((F, F), lambda b, i: (0, 0)),                # Wout^T resident
            pl.BlockSpec((1, F), lambda b, i: (0, 0)),                # bias resident
        ],
        out_specs=pl.BlockSpec((1, tq, F), lambda b, i: (b, i, 0)),
        compiler_params=pltpu.CompilerParams(
            dimension_semantics=("parallel", "parallel"),
            vmem_limit_bytes=int(min(max(2 * vmem_need, 16 * 2**20), 64 * 2**20))),
        cost_estimate=pl.CostEstimate(
            flops=int(flops),
            transcendentals=int(B * n_head * T1 * T2),
            bytes_accessed=int(bytes_accessed)),
        scratch_shapes=[pltpu.VMEM((tq, F), jnp.float32)],
    )(q_arr, k_arr, v_arr, mask_i8, wo_t_bf16, bo_row_f32)


# ---------------------------------------------------------------------------
# Parameters (PyTorch nn.Linear default uniform init, torch weight layout)
# ---------------------------------------------------------------------------
def init_params(n_head, n_feat, key):
    assert n_feat % n_head == 0
    ks = jax.random.split(key, 8)

    def u(k, shape, fan_in):
        bound = 1.0 / math.sqrt(fan_in)
        return jax.random.uniform(k, shape, jnp.float32, -bound, bound)

    F = n_feat
    return {
        "wq": u(ks[0], (F, F), F), "bq": u(ks[1], (F,), F),
        "wk": u(ks[2], (F, F), F), "bk": u(ks[3], (F,), F),
        "wv": u(ks[4], (F, F), F), "bv": u(ks[5], (F,), F),
        "wo": u(ks[6], (F, F), F), "bo": u(ks[7], (F,), F),
    }


def prepare_params(params, n_head):
    """One-time: transpose weights, fold 1/sqrt(d_k) into the Q projection,
    stack QKV for the fused projection, cast weights to bf16."""
    F = params["wq"].shape[0]
    d_k = F // n_head
    scale = 1.0 / math.sqrt(d_k)

    wq_t = (params["wq"] * scale).T                # fold score scaling into Wq
    bq = params["bq"] * scale
    wk_t, wv_t, wo_t = params["wk"].T, params["wv"].T, params["wo"].T
    bf16 = lambda a: a.astype(jnp.bfloat16)

    return {
        # fused QKV (self-attention fast path)
        "wqkv_t": bf16(jnp.concatenate([wq_t, wk_t, wv_t], axis=1)),       # (F, 3F)
        "bqkv": jnp.concatenate([bq, params["bk"], params["bv"]]).reshape(1, -1),
        # separate projections (cross-attention path)
        "wq_t": bf16(wq_t), "bq": bq.reshape(1, -1),
        "wk_t": bf16(wk_t), "bk": params["bk"].reshape(1, -1),
        "wv_t": bf16(wv_t), "bv": params["bv"].reshape(1, -1),
        # output projection
        "wo_t": bf16(wo_t), "bo": params["bo"].reshape(1, -1),
    }


# ---------------------------------------------------------------------------
# Forward pass (matches MultiHeadedAttention.forward semantics, eval mode)
# ---------------------------------------------------------------------------
def multi_headed_attention_forward(kparams, query, key, value, mask, *, n_head):
    """query:(B,T1,F)  key/value:(B,T2,F)  mask:(B,1,T2) or (B,T1,T2) or None."""
    B, T1, F = query.shape
    T2 = key.shape[1]
    assert F % n_head == 0

    if mask is None:
        mask_i8 = jnp.ones((B, 1, T2), dtype=jnp.int8)
    else:
        assert mask.shape[1] in (1, T1), "mask must be (B,1,T2) or (B,T1,T2)"
        mask_i8 = mask.astype(jnp.int8)

    if (query is key) and (key is value) and (F % 128 == 0):
        # Self-attention: single fused QKV projection; feed the fused (B,T,3F)
        # result straight into the attention kernel via lane-block indices.
        qkv = _pallas_linear(query.reshape(B * T1, F),
                             kparams["wqkv_t"], kparams["bqkv"]).reshape(B, T1, 3 * F)
        return _pallas_attention(qkv, qkv, qkv, mask_i8,
                                 kparams["wo_t"], kparams["bo"],
                                 n_head=n_head, n_feat=F,
                                 q_block=0, k_block=1, v_block=2)

    # Cross-attention (or F not lane-aligned): separate projections.
    q3 = _pallas_linear(query.reshape(B * T1, F),
                        kparams["wq_t"], kparams["bq"]).reshape(B, T1, F)
    k3 = _pallas_linear(key.reshape(B * T2, F),
                        kparams["wk_t"], kparams["bk"]).reshape(B, T2, F)
    v3 = _pallas_linear(value.reshape(B * T2, F),
                        kparams["wv_t"], kparams["bv"]).reshape(B, T2, F)
    return _pallas_attention(q3, k3, v3, mask_i8, kparams["wo_t"], kparams["bo"],
                             n_head=n_head, n_feat=F)


# ---------------------------------------------------------------------------
# Pure-JAX reference (mirrors the PyTorch module) for correctness checks
# ---------------------------------------------------------------------------
def _reference(params, query, key, value, mask, n_head):
    B, T1, F = query.shape
    T2 = key.shape[1]
    d_k = F // n_head
    hi = jax.lax.Precision.HIGHEST

    def lin(x, w, b):
        return jnp.einsum("btf,gf->btg", x, w, precision=hi) + b

    q = lin(query, params["wq"], params["bq"]).reshape(B, T1, n_head, d_k)
    k = lin(key, params["wk"], params["bk"]).reshape(B, T2, n_head, d_k)
    v = lin(value, params["wv"], params["bv"]).reshape(B, T2, n_head, d_k)
    q = jnp.transpose(q, (0, 2, 1, 3))
    k = jnp.transpose(k, (0, 2, 1, 3))
    v = jnp.transpose(v, (0, 2, 1, 3))

    scores = jnp.einsum("bhqd,bhkd->bhqk", q, k, precision=hi) / math.sqrt(d_k)
    valid = (mask[:, None, :, :] != 0)
    scores = jnp.where(valid, scores, -jnp.inf)
    attn = jax.nn.softmax(scores, axis=-1)
    attn = jnp.where(valid, attn, 0.0)
    ctx = jnp.einsum("bhqk,bhkd->bhqd", attn, v, precision=hi)
    ctx = jnp.transpose(ctx, (0, 2, 1, 3)).reshape(B, T1, F)
    return jnp.einsum("btf,gf->btg", ctx, params["wo"], precision=hi) + params["bo"]


if __name__ == "__main__":
    key = jax.random.PRNGKey(0)
    B, T, n_feat, n_head = 2, 16, 128, 4
    k_params, k_x, k_y = jax.random.split(key, 3)

    params = init_params(n_head, n_feat, k_params)
    kparams = prepare_params(params, n_head)

    x = jax.random.normal(k_x, (B, T, n_feat), dtype=jnp.float32)

    # Test 1: self-attention, (B,1,T2) padding mask (fused QKV + lane-block path).
    mask1 = jnp.ones((B, 1, T), dtype=jnp.bool_).at[1, 0, T - 3:].set(False)
    out1 = jax.block_until_ready(
        multi_headed_attention_forward(kparams, x, x, x, mask1, n_head=n_head))
    assert out1.shape == (B, T, n_feat), out1.shape
    ref1 = _reference(params, x, x, x, mask1, n_head)
    err1 = float(jnp.max(jnp.abs(out1 - ref1)))
    assert err1 < 5e-2, f"test1 max abs err vs reference: {err1}"

    # Test 2: self-attention, (B,T,T) causal mask with one fully-masked query row.
    mask2 = jnp.tile(jnp.tril(jnp.ones((T, T), dtype=jnp.bool_))[None], (B, 1, 1))
    mask2 = mask2.at[0, 5, :].set(False)
    out2 = jax.block_until_ready(
        multi_headed_attention_forward(kparams, x, x, x, mask2, n_head=n_head))
    ref2 = _reference(params, x, x, x, mask2, n_head)
    err2 = float(jnp.max(jnp.abs(out2 - ref2)))
    assert err2 < 5e-2, f"test2 max abs err vs reference: {err2}"

    # Test 3: cross-attention (T2 != T1), separate-projection path.
    T2 = 24
    y = jax.random.normal(k_y, (B, T2, n_feat), dtype=jnp.float32)
    mask3 = jnp.ones((B, 1, T2), dtype=jnp.bool_).at[0, 0, T2 - 5:].set(False)
    out3 = jax.block_until_ready(
        multi_headed_attention_forward(kparams, x, y, y, mask3, n_head=n_head))
    ref3 = _reference(params, x, y, y, mask3, n_head)
    err3 = float(jnp.max(jnp.abs(out3 - ref3)))
    assert err3 < 5e-2, f"test3 max abs err vs reference: {err3}"

    assert all(bool(jnp.all(jnp.isfinite(o))) for o in (out1, out2, out3))
    print("KERNEL_OK")
</pallas_src>

<mosaic_0001>
module attributes {stable_mosaic.version = 11 : i64} {
  func.func @_linear_kernel(%arg0: i32, %arg1: memref<32x128xf32, #tpu.memory_space<vmem>>, %arg2: memref<128x384xbf16, #tpu.memory_space<vmem>>, %arg3: memref<1x384xf32, #tpu.memory_space<vmem>>, %arg4: memref<32x384xbf16, #tpu.memory_space<vmem>>) attributes {dimension_semantics = [#tpu.dimension_semantics<parallel>], iteration_bounds = array<i64: 1>, scalar_prefetch = 0 : i64, scratch_operands = 0 : i64, tpu.core_type = #tpu.core_type<tc>, window_params = [{transform_indices = @transform_0, window_bounds = array<i64: 32, 128>}, {pipeline_mode = #tpu.pipeline_mode<synchronous>, transform_indices = @transform_1, window_bounds = array<i64: 128, 384>}, {pipeline_mode = #tpu.pipeline_mode<synchronous>, transform_indices = @transform_2, window_bounds = array<i64: 1, 384>}, {transform_indices = @transform_3, window_bounds = array<i64: 32, 384>}]} {
    %c0 = arith.constant 0 : index
    %c0_0 = arith.constant 0 : index
    %0 = vector.load %arg1[%c0, %c0_0] : memref<32x128xf32, #tpu.memory_space<vmem>>, vector<32x128xf32>
    %1 = arith.truncf %0 : vector<32x128xf32> to vector<32x128xbf16>
    %c0_1 = arith.constant 0 : index
    %c0_2 = arith.constant 0 : index
    %2 = vector.load %arg2[%c0_1, %c0_2] : memref<128x384xbf16, #tpu.memory_space<vmem>>, vector<128x384xbf16>
    %cst = arith.constant dense<0.000000e+00> : vector<32x384xf32>
    %3 = tpu.matmul %1, %2, %cst {dimension_numbers = #tpu.dot_dimension_numbers<[1], [0], [0], [1], [0, 0, 1, 1], [], []>} : vector<32x128xbf16>, vector<128x384xbf16>, vector<32x384xf32> -> vector<32x384xf32>
    %c0_3 = arith.constant 0 : index
    %c0_4 = arith.constant 0 : index
    %4 = vector.load %arg3[%c0_3, %c0_4] : memref<1x384xf32, #tpu.memory_space<vmem>>, vector<1x384xf32>
    %5 = vector.broadcast %4 : vector<1x384xf32> to vector<32x384xf32>
    %6 = arith.addf %3, %5 : vector<32x384xf32>
    %7 = arith.truncf %6 : vector<32x384xf32> to vector<32x384xbf16>
    %c0_5 = arith.constant 0 : index
    %c0_6 = arith.constant 0 : index
    %8 = vector.load %arg4[%c0_5, %c0_6] : memref<32x384xbf16, #tpu.memory_space<vmem>>, vector<32x384xbf16>
    tpu.vector_store %arg4[%c0_5, %c0_6], %7 {strides = array<i32>} : memref<32x384xbf16, #tpu.memory_space<vmem>>, vector<32x384xbf16>,
    return
  }
  func.func @transform_0(%arg0: i32) -> (i32, i32) {
    %c0_i32 = arith.constant 0 : i32
    %c0_i32_0 = arith.constant 0 : i32
    return %arg0, %c0_i32 : i32, i32
  }
  func.func @transform_1(%arg0: i32) -> (i32, i32) {
    %c0_i32 = arith.constant 0 : i32
    %c0_i32_0 = arith.constant 0 : i32
    %c0_i32_1 = arith.constant 0 : i32
    return %c0_i32, %c0_i32_0 : i32, i32
  }
  func.func @transform_2(%arg0: i32) -> (i32, i32) {
    %c0_i32 = arith.constant 0 : i32
    %c0_i32_0 = arith.constant 0 : i32
    %c0_i32_1 = arith.constant 0 : i32
    return %c0_i32, %c0_i32_0 : i32, i32
  }
  func.func @transform_3(%arg0: i32) -> (i32, i32) {
    %c0_i32 = arith.constant 0 : i32
    %c0_i32_0 = arith.constant 0 : i32
    return %arg0, %c0_i32 : i32, i32
  }
}

</mosaic_0001>

<llo_original>
// kernel: tpu_custom_call.1
$region0: #{tpu_custom_call.1}
  #allocation0 [shape = 'u32[]', space=smem, size = 0x4, offset = 0x4, fixed_abs, tag = 'smem constant byte address 0x4 - core index']
  #allocation1 [shape = 'u32[144,128]{1,0:T(1,128)}', space=vmem, size = 0x12000, scoped, tag = 'internal scratch']
  %s0 = inlined_call_operand.hbm [shape: f32[32,128], index: 0, kind: input, shape index: {}]
  %s1 = inlined_call_operand.hbm [shape: bf16[128,384], index: 1, kind: input, shape index: {}]
  %s2 = inlined_call_operand.vmem [shape: f32[1,384], index: 2, kind: input, shape index: {}]
  %s3 = inlined_call_operand.hbm [shape: bf16[32,384], index: 3, kind: output, shape index: {}]
  %s4 = sld [smem:[#allocation0]]
  $region30: #{tpu_custom_call.1} parent=0
    _
  %s6 = ssub.s32 1, %s4
  %s7 = scalar_select 0, %s6, %s4
  $region1: #{tpu_custom_call.1} parent=0
    #allocation2 [shape = 'u8[16384]{0}', space=vmem, size = 0x4000, scoped, tag = 'input window, operand 0, single buffered']
    #allocation3 [shape = 's32[1]{0}', space=sflag, size = 0x4, scoped, tag = 'scoped memory for tpu_custom_call.1']
    #allocation4 [shape = 's32[1]{0}', space=sflag, size = 0x4, scoped, tag = 'scoped memory for tpu_custom_call.1']
    #allocation5 [shape = 'u8[98304]{0}', space=vmem, size = 0x18000, scoped, tag = 'input window, operand 1, single buffered']
    #allocation6 [shape = 's32[1]{0}', space=sflag, size = 0x4, scoped, tag = 'scoped memory for tpu_custom_call.1']
    #allocation7 [shape = 'u8[24576]{0}', space=vmem, size = 0x6000, scoped, tag = 'output window, operand 0, single buffered']
    %8 = vsyncpa [#allocation3], 0
    %9 = vsyncpa [#allocation6], 0
    %10 = vsyncpa [#allocation4], 0
    // Predicated region
    $region2: #{tpu_custom_call.1} parent=1 // pred_check
      _
    $region3: #{tpu_custom_call.1} parent=1 // pred_check_branch
      %12 = sbr.rel (0) target = $region5
    $region4: #{tpu_custom_call.1} parent=1 // pred_region
      %s14 = ssub.s32 512, 512
      %15 = vsyncadd [#allocation3], %s14
      %s16 = sshll.u32 [#allocation2], 4
      %s17 = int_to_ptr.vmem [resolvable:$true] %s16
      %22 = dma.hbm_to_vmem [thread:$0]  %s0, 512, %s17, [#allocation3], 128, 128, 8
    $region5: #{tpu_custom_call.1} parent=1 // pred_fallthru
      _
    // Predicated region
    $region6: #{tpu_custom_call.1} parent=1 // pred_check
      _
    $region7: #{tpu_custom_call.1} parent=1 // pred_check_branch
      %24 = sbr.rel (0) target = $region9
    $region8: #{tpu_custom_call.1} parent=1 // pred_region
      %s26 = ssub.s32 3072, 3072
      %27 = vsyncadd [#allocation6], %s26
      %s28 = sshll.u32 [#allocation5], 4
      %s29 = int_to_ptr.vmem [resolvable:$true] %s28
      %34 = dma.hbm_to_vmem [thread:$0]  %s1, 3072, %s29, [#allocation6], 192, 192, 12
    $region9: #{tpu_custom_call.1} parent=1 // pred_fallthru
      _
    // Predicated region
    $region10: #{tpu_custom_call.1} parent=1 // pred_check
      _
    $region11: #{tpu_custom_call.1} parent=1 // pred_check_branch
      %36 = sbr.rel (0) target = $region13
    $region12: #{tpu_custom_call.1} parent=1 // pred_region
      _
    $region13: #{tpu_custom_call.1} parent=1 // pred_fallthru
      _
    // Predicated region
    $region14: #{tpu_custom_call.1} parent=1 // pred_check
      _
    $region15: #{tpu_custom_call.1} parent=1 // pred_check_branch
      %38 = sbr.rel (0) target = $region17
    $region16: #{tpu_custom_call.1} parent=1 // pred_region
      %39 = dma.done [#allocation3], 512
    $region17: #{tpu_custom_call.1} parent=1 // pred_fallthru
      _
    // Predicated region
    $region18: #{tpu_custom_call.1} parent=1 // pred_check
      _
    $region19: #{tpu_custom_call.1} parent=1 // pred_check_branch
      %41 = sbr.rel (0) target = $region21
    $region20: #{tpu_custom_call.1} parent=1 // pred_region
      %42 = dma.done [#allocation6], 3072
    $region21: #{tpu_custom_call.1} parent=1 // pred_fallthru
      _
    %v44 = vld [vmem:[#allocation2] sm:$0xff]
    %v45 = vld [vmem:[#allocation2 + $0x8] sm:$0xff]
    %v46 = vld [vmem:[#allocation2 + $0x10] sm:$0xff]
    %v47 = vld [vmem:[#allocation2 + $0x18] sm:$0xff]
    %v48 = vpack.c.bf16 %v45, %v44
    %v49 = vpack.c.bf16 %v47, %v46
    %v50 = vld [vmem:[#allocation5] sm:$0xff]
    %v51 = vld [vmem:[#allocation5 + $0x8] sm:$0xf]
    %v52 = vld [vmem:[#allocation5 + $0xc] sm:$0xff]
    %v53 = vld [vmem:[#allocation5 + $0x14] sm:$0xf]
    %v54 = vld [vmem:[#allocation5 + $0x18] sm:$0xff]
    %v55 = vld [vmem:[#allocation5 + $0x20] sm:$0xf]
    %v56 = vld [vmem:[#allocation5 + $0x24] sm:$0xff]
    %v57 = vld [vmem:[#allocation5 + $0x2c] sm:$0xf]
    %v58 = vld [vmem:[#allocation5 + $0x30] sm:$0xff]
    %v59 = vld [vmem:[#allocation5 + $0x38] sm:$0xf]
    %v60 = vld [vmem:[#allocation5 + $0x3c] sm:$0xff]
    %v61 = vld [vmem:[#allocation5 + $0x44] sm:$0xf]
    %v62 = vld [vmem:[#allocation5 + $0x48] sm:$0xff]
    %v63 = vld [vmem:[#allocation5 + $0x50] sm:$0xf]
    %v64 = vld [vmem:[#allocation5 + $0x54] sm:$0xff]
    %v65 = vld [vmem:[#allocation5 + $0x5c] sm:$0xf]
    %v66 = vld [vmem:[#allocation5 + $0x60] sm:$0xff]
    %v67 = vld [vmem:[#allocation5 + $0x68] sm:$0xf]
    %v68 = vld [vmem:[#allocation5 + $0x6c] sm:$0xff]
    %v69 = vld [vmem:[#allocation5 + $0x74] sm:$0xf]
    %v70 = vld [vmem:[#allocation5 + $0x78] sm:$0xff]
    %v71 = vld [vmem:[#allocation5 + $0x80] sm:$0xf]
    %v72 = vld [vmem:[#allocation5 + $0x84] sm:$0xff]
    %v73 = vld [vmem:[#allocation5 + $0x8c] sm:$0xf]
    %v74 = vld [vmem:[#allocation5 + $0x90] sm:$0xff]
    %v75 = vld [vmem:[#allocation5 + $0x98] sm:$0xf]
    %v76 = vld [vmem:[#allocation5 + $0x9c] sm:$0xff]
    %v77 = vld [vmem:[#allocation5 + $0xa4] sm:$0xf]
    %v78 = vld [vmem:[#allocation5 + $0xa8] sm:$0xff]
    %v79 = vld [vmem:[#allocation5 + $0xb0] sm:$0xf]
    %v80 = vld [vmem:[#allocation5 + $0xb4] sm:$0xff]
    %v81 = vld [vmem:[#allocation5 + $0xbc] sm:$0xf]
    %v82 = vld [vmem:[%s2] sm:$0x7]
    %v84 = vlaneseq
    %v85 = vshrl.u32 %v84, 7
    %v86 = vsub.s32 0, %v85
    %v87 = vrot.slane %v82, %v86
    %v88 = vlaneseq
    %v89 = vshrl.u32 %v88, 7
    %v90 = vsub.s32 1, %v89
    %v91 = vrot.slane %v82, %v90
    %v92 = vlaneseq
    %v93 = vshrl.u32 %v92, 7
    %v94 = vsub.s32 2, %v93
    %v95 = vrot.slane %v82, %v94
    %v131 = vunpack.c.l.b16 %v50
    %v132 = vunpack.c.h.b16 %v50
    %v133 = vunpack.c.l.b16 %v51
    %v134 = vunpack.c.l.b16 %v52
    %v135 = vunpack.c.h.b16 %v52
    %v136 = vunpack.c.l.b16 %v53
    %v137 = vunpack.c.l.b16 %v54
    %v138 = vunpack.c.h.b16 %v54
    %v139 = vunpack.c.l.b16 %v55
    %v140 = vunpack.c.l.b16 %v56
    %v141 = vunpack.c.h.b16 %v56
    %v142 = vunpack.c.l.b16 %v57
    %v143 = vunpack.c.l.b16 %v58
    %v144 = vunpack.c.h.b16 %v58
    %v145 = vunpack.c.l.b16 %v59
    %v146 = vunpack.c.l.b16 %v60
    %v147 = vunpack.c.h.b16 %v60
    %v148 = vunpack.c.l.b16 %v61
    %v149 = vunpack.c.l.b16 %v62
    %v150 = vunpack.c.h.b16 %v62
    %v151 = vunpack.c.l.b16 %v63
    %v152 = vunpack.c.l.b16 %v64
    %v153 = vunpack.c.h.b16 %v64
    %v154 = vunpack.c.l.b16 %v65
    %v155 = vunpack.c.l.b16 %v66
    %v156 = vunpack.c.h.b16 %v66
    %v157 = vunpack.c.l.b16 %v67
    %v158 = vunpack.c.l.b16 %v68
    %v159 = vunpack.c.h.b16 %v68
    %v160 = vunpack.c.l.b16 %v69
    %v161 = vunpack.c.l.b16 %v70
    %v162 = vunpack.c.h.b16 %v70
    %v163 = vunpack.c.l.b16 %v71
    %v164 = vunpack.c.l.b16 %v72
    %v165 = vunpack.c.h.b16 %v72
    %v166 = vunpack.c.l.b16 %v73
    %v167 = vunpack.c.l.b16 %v74
    %v168 = vunpack.c.h.b16 %v74
    %v169 = vunpack.c.l.b16 %v75
    %v170 = vunpack.c.l.b16 %v76
    %v171 = vunpack.c.h.b16 %v76
    %v172 = vunpack.c.l.b16 %v77
    %v173 = vunpack.c.l.b16 %v78
    %v174 = vunpack.c.h.b16 %v78
    %v175 = vunpack.c.l.b16 %v79
    %v176 = vunpack.c.l.b16 %v80
    %v177 = vunpack.c.h.b16 %v80
    %v178 = vunpack.c.l.b16 %v81
    %v179 = vpack.c.b16 %v134, %v131
    %v180 = vpack.c.b16 %v135, %v132
    %v181 = vpack.c.b16 %v136, %v133
    %v182 = vpack.c.b16 %v140, %v137
    %v183 = vpack.c.b16 %v141, %v138
    %v184 = vpack.c.b16 %v142, %v139
    %v185 = vpack.c.b16 %v146, %v143
    %v186 = vpack.c.b16 %v147, %v144
    %v187 = vpack.c.b16 %v148, %v145
    %v188 = vpack.c.b16 %v152, %v149
    %v189 = vpack.c.b16 %v153, %v150
    %v190 = vpack.c.b16 %v154, %v151
    %v191 = vpack.c.b16 %v158, %v155
    %v192 = vpack.c.b16 %v159, %v156
    %v193 = vpack.c.b16 %v160, %v157
    %v194 = vpack.c.b16 %v164, %v161
    %v195 = vpack.c.b16 %v165, %v162
    %v196 = vpack.c.b16 %v166, %v163
    %v197 = vpack.c.b16 %v170, %v167
    %v198 = vpack.c.b16 %v171, %v168
    %v199 = vpack.c.b16 %v172, %v169
    %v200 = vpack.c.b16 %v176, %v173
    %v201 = vpack.c.b16 %v177, %v174
    %v202 = vpack.c.b16 %v178, %v175
    %227 = vmatprep.subr.bf16.mxu0 %v180
    %228 = vmatpush1.bf16.msra.mxu0 %v179
    %229 = vmatprep.subr.bf16.mxu0 %v183
    %230 = vmatpush1.bf16.msra.mxu0 %v182
    %231 = vmatprep.subr.bf16.mxu0 %v186
    %232 = vmatpush1.bf16.msra.mxu0 %v185
    %233 = vmatprep.subr.bf16.mxu0 %v189
    %234 = vmatpush1.bf16.msra.mxu0 %v188
    %235 = vmatprep.subr.bf16.mxu0 %v192
    %236 = vmatpush1.bf16.msra.mxu0 %v191
    %237 = vmatprep.subr.bf16.mxu0 %v195
    %238 = vmatpush1.bf16.msra.mxu0 %v194
    %239 = vmatprep.subr.bf16.mxu0 %v198
    %240 = vmatpush1.bf16.msra.mxu0 %v197
    %241 = vmatprep.subr.bf16.mxu0 %v201
    %242 = vmatpush1.bf16.msra.mxu0 %v200
    %243 = vmatprep.subr.bf16.mxu0 0
    %244 = vmatpush1.bf16.msra.mxu0 0
    %245 = vmatprep.subr.bf16.mxu0 0
    %246 = vmatpush1.bf16.msra.mxu0 0
    %247 = vmatprep.subr.bf16.mxu0 0
    %248 = vmatpush1.bf16.msra.mxu0 0
    %249 = vmatprep.subr.bf16.mxu0 0
    %250 = vmatpush1.bf16.msra.mxu0 0
    %251 = vmatprep.subr.bf16.mxu0 0
    %252 = vmatpush1.bf16.msra.mxu0 0
    %253 = vmatprep.subr.bf16.mxu0 0
    %254 = vmatpush1.bf16.msra.mxu0 0
    %255 = vmatprep.subr.bf16.mxu0 0
    %256 = vmatpush1.bf16.msra.mxu0 0
    %257 = vmatprep.subr.bf16.mxu0 0
    %258 = vmatpush1.bf16.msra.mxu0 0
    %259 = vmatprep.mubr.bf16.mxu0 0
    %260 = vmatmul.mubr.bf16.gmra.mrb[0].mxu0 %v48
    %v261 = vpop.f32.mrb[0].mxu0
    %v262 = vadd.f32 %v87, %v261
    %v263 = vpop.f32.mrb[0].mxu0
    %v264 = vadd.f32 %v91, %v263
    %v265 = vpop.f32.mrb[0].mxu0
    %v266 = vadd.f32 %v87, %v265
    %v267 = vpop.f32.mrb[0].mxu0
    %v268 = vadd.f32 %v91, %v267
    %269 = vmatprep.mubr.bf16.mxu0 0
    %270 = vmatmul.mubr.bf16.gmra.mrb[0].mxu0 %v49
    %v271 = vpop.f32.mrb[0].mxu0
    %v272 = vadd.f32 %v87, %v271
    %v273 = vpop.f32.mrb[0].mxu0
    %v274 = vadd.f32 %v91, %v273
    %v275 = vpop.f32.mrb[0].mxu0
    %v276 = vadd.f32 %v87, %v275
    %v277 = vpop.f32.mrb[0].mxu0
    %v278 = vadd.f32 %v91, %v277
    %279 = vdwg.mxu0
    %280 = vmatprep.subr.bf16.mxu0 0
    %281 = vmatpush1.bf16.msra.mxu0 %v181
    %282 = vmatprep.subr.bf16.mxu0 0
    %283 = vmatpush1.bf16.msra.mxu0 %v184
    %284 = vmatprep.subr.bf16.mxu0 0
    %285 = vmatpush1.bf16.msra.mxu0 %v187
    %286 = vmatprep.subr.bf16.mxu0 0
    %287 = vmatpush1.bf16.msra.mxu0 %v190
    %288 = vmatprep.subr.bf16.mxu0 0
    %289 = vmatpush1.bf16.msra.mxu0 %v193
    %290 = vmatprep.subr.bf16.mxu0 0
    %291 = vmatpush1.bf16.msra.mxu0 %v196
    %292 = vmatprep.subr.bf16.mxu0 0
    %293 = vmatpush1.bf16.msra.mxu0 %v199
    %294 = vmatprep.subr.bf16.mxu0 0
    %295 = vmatpush1.bf16.msra.mxu0 %v202
    %296 = vmatprep.subr.bf16.mxu0 0
    %297 = vmatpush1.bf16.msra.mxu0 0
    %298 = vmatprep.subr.bf16.mxu0 0
    %299 = vmatpush1.bf16.msra.mxu0 0
    %300 = vmatprep.subr.bf16.mxu0 0
    %301 = vmatpush1.bf16.msra.mxu0 0
    %302 = vmatprep.subr.bf16.mxu0 0
    %303 = vmatpush1.bf16.msra.mxu0 0
    %304 = vmatprep.subr.bf16.mxu0 0
    %305 = vmatpush1.bf16.msra.mxu0 0
    %306 = vmatprep.subr.bf16.mxu0 0
    %307 = vmatpush1.bf16.msra.mxu0 0
    %308 = vmatprep.subr.bf16.mxu0 0
    %309 = vmatpush1.bf16.msra.mxu0 0
    %310 = vmatprep.subr.bf16.mxu0 0
    %311 = vmatpush1.bf16.msra.mxu0 0
    %312 = vmatprep.mubr.bf16.mxu0 0
    %313 = vmatmul.mubr.bf16.gmra.mrb[0].mxu0 %v48
    %v314 = vpop.f32.mrb[0].mxu0
    %v315 = vadd.f32 %v95, %v314
    %v316 = vpop.f32.mrb[0].mxu0
    %v317 = vpop.f32.mrb[0].mxu0
    %v318 = vadd.f32 %v95, %v317
    %v319 = vpop.f32.mrb[0].mxu0
    %320 = vmatprep.mubr.bf16.mxu0 0
    %321 = vmatmul.mubr.bf16.gmra.mrb[0].mxu0 %v49
    %v322 = vpop.f32.mrb[0].mxu0
    %v323 = vadd.f32 %v95, %v322
    %v324 = vpop.f32.mrb[0].mxu0
    %v325 = vpop.f32.mrb[0].mxu0
    %v326 = vadd.f32 %v95, %v325
    %v327 = vpop.f32.mrb[0].mxu0
    %328 = vdwg.mxu0
    %v329 = vpack.c.bf16 %v266, %v262
    %v330 = vpack.c.bf16 %v268, %v264
    %v331 = vpack.c.bf16 %v318, %v315
    %v332 = vpack.c.bf16 %v276, %v272
    %v333 = vpack.c.bf16 %v278, %v274
    %v334 = vpack.c.bf16 %v326, %v323
    %v341 = vunpack.c.l.b16 %v329
    %v342 = vunpack.c.l.b16 %v330
    %v343 = vunpack.c.l.b16 %v331
    %v344 = vunpack.c.h.b16 %v329
    %v345 = vunpack.c.h.b16 %v330
    %v346 = vunpack.c.h.b16 %v331
    %v347 = vunpack.c.l.b16 %v332
    %v348 = vunpack.c.l.b16 %v333
    %v349 = vunpack.c.l.b16 %v334
    %v350 = vunpack.c.h.b16 %v332
    %v351 = vunpack.c.h.b16 %v333
    %v352 = vunpack.c.h.b16 %v334
    %v353 = vpack.c.b16 %v342, %v341
    %v354 = vpack.c.b16 %v343, %v343
    %v355 = vpack.c.b16 %v345, %v344
    %v356 = vpack.c.b16 %v346, %v346
    %v357 = vpack.c.b16 %v348, %v347
    %v358 = vpack.c.b16 %v349, %v349
    %v359 = vpack.c.b16 %v351, %v350
    %v360 = vpack.c.b16 %v352, %v352
    %369 = vst [vmem:[#allocation7] sm:$0xff] %v353
    %370 = vst [vmem:[#allocation7 + $0x8] sm:$0xf] %v354
    %371 = vst [vmem:[#allocation7 + $0xc] sm:$0xff] %v355
    %372 = vst [vmem:[#allocation7 + $0x14] sm:$0xf] %v356
    %373 = vst [vmem:[#allocation7 + $0x18] sm:$0xff] %v357
    %374 = vst [vmem:[#allocation7 + $0x20] sm:$0xf] %v358
    %375 = vst [vmem:[#allocation7 + $0x24] sm:$0xff] %v359
    %376 = vst [vmem:[#allocation7 + $0x2c] sm:$0xf] %v360
    // Predicated region
    $region22: #{tpu_custom_call.1} parent=1 // pred_check
      _
    $region23: #{tpu_custom_call.1} parent=1 // pred_check_branch
      %378 = sbr.rel (0) target = $region25
    $region24: #{tpu_custom_call.1} parent=1 // pred_region
      %s380 = ssub.s32 768, 768
      %381 = vsyncadd [#allocation4], %s380
      %s382 = sshll.u32 [#allocation7], 4
      %s383 = int_to_ptr.vmem [resolvable:$true] %s382
      %388 = dma.vmem_to_hbm [thread:$0]  %s383, 768, %s3, [#allocation4], 192, 192, 12
    $region25: #{tpu_custom_call.1} parent=1 // pred_fallthru
      _
    // Predicated region
    $region26: #{tpu_custom_call.1} parent=1 // pred_check
      _
    $region27: #{tpu_custom_call.1} parent=1 // pred_check_branch
      %390 = sbr.rel (0) target = $region29
    $region28: #{tpu_custom_call.1} parent=1 // pred_region
      %391 = dma.done [#allocation4], 768
    $region29: #{tpu_custom_call.1} parent=1 // pred_fallthru
      _
    %392 = vsyncpa [#allocation3], 1
    %393 = vsyncpa [#allocation6], 1
    %394 = vsyncpa [#allocation4], 1

</llo_original>
